<compile_context>
chip_gen: v7x
topology: tpu7x:2x2x1
jax: 0.10.0
libtpu: 0.0.40
codegen_flags: <defaults>
</compile_context>

<pallas_src>
import jax
import jax.numpy as jnp
from jax.experimental import pallas as pl
from jax.experimental.pallas import tpu as pltpu


def _critic_kernel(x_ref, w2_ref, c_ref, o_ref):
    # x_ref : (2, TB)   observations, batch on the lane axis
    # w2_ref: (16, 16)  W2 in (out, in) orientation
    # c_ref : (16, 8)   packed column vectors (see _pack_params)
    # o_ref : (1, TB)   value output, batch on the lane axis
    x0 = x_ref[0:1, :]                     # (1, TB)
    x1 = x_ref[1:2, :]                     # (1, TB)

    w1_0 = c_ref[:, 0:1]                   # (16, 1)  W1[:, 0]
    w1_1 = c_ref[:, 1:2]                   # (16, 1)  W1[:, 1]
    b1 = c_ref[:, 2:3]                     # (16, 1)
    b2 = c_ref[:, 3:4]                     # (16, 1)
    w3 = c_ref[:, 4:5]                     # (16, 1)  W3[0, :]
    b3 = c_ref[0:1, 5:6]                   # (1, 1)

    # Layer 1 (2 -> 16): K=2, keep it on the VPU as two broadcast FMAs.
    h1 = jnp.maximum(w1_0 * x0 + w1_1 * x1 + b1, 0.0)            # (16, TB)

    # Layer 2 (16 -> 16): one small MXU matmul, batch stays on lanes.
    h2 = jnp.dot(w2_ref[...], h1, preferred_element_type=jnp.float32) + b2
    h2 = jnp.maximum(h2, 0.0)                                    # (16, TB)

    # Layer 3 (16 -> 1): VPU multiply + sublane reduce (no N=1 matmul).
    v = jnp.sum(w3 * h2, axis=0, keepdims=True) + b3             # (1, TB)

    o_ref[...] = v.astype(o_ref.dtype)


def _pack_params(params):
    """Pack the 6 PyTorch-shaped tensors into 2 kernel operands.

    Returns (W2 (16,16), column slab (16,8)) where the slab columns are
    [W1[:,0], W1[:,1], b1, b2, W3[0,:], b3, 0, 0].
    """
    w1, b1, w2, b2, w3, b3 = params
    cols = jnp.zeros((16, 8), jnp.float32)
    cols = cols.at[:, 0].set(w1[:, 0])
    cols = cols.at[:, 1].set(w1[:, 1])
    cols = cols.at[:, 2].set(b1)
    cols = cols.at[:, 3].set(b2)
    cols = cols.at[:, 4].set(w3[0, :])
    cols = cols.at[:, 5].set(b3[0])
    return w2.astype(jnp.float32), cols


def critic_forward(obs, params, *, tb=512):
    """obs: (B, 2) float32 -> value (B, 1) float32."""
    B, F = obs.shape
    assert F == 2, "Critic expects obs feature dim of 2"
    # NOTE: for tiny batches (<= a few hundred rows) a plain XLA MLP beats any
    # kernel launch; this path keeps the Pallas kernel exercised at toy sizes.

    w2_arr, col_slab = _pack_params(params)
    x_t = obs.astype(jnp.float32).T                  # (2, B): batch on lanes

    # Clamp the lane tile for tiny batches; always a multiple of 128.
    tb = max(128, min(tb, ((B + 127) // 128) * 128))
    grid = (pl.cdiv(B, tb),)

    out_t = pl.pallas_call(
        _critic_kernel,
        out_shape=jax.ShapeDtypeStruct((1, B), jnp.float32),
        grid_spec=pltpu.PrefetchScalarGridSpec(
            num_scalar_prefetch=0,
            grid=grid,
            in_specs=[
                pl.BlockSpec((2, tb), lambda i: (0, i)),    # obs tile
                pl.BlockSpec((16, 16), lambda i: (0, 0)),   # W2 (whole array)
                pl.BlockSpec((16, 8), lambda i: (0, 0)),    # packed columns
            ],
            out_specs=pl.BlockSpec((1, tb), lambda i: (0, i)),
        ),
        compiler_params=pltpu.CompilerParams(
            dimension_semantics=("parallel",)),
    )(x_t, w2_arr, col_slab)

    return out_t.reshape(B, 1)


def init_critic_params(key):
    """PyTorch-shaped params: Linear(in,out) weight is (out, in)."""
    k1, k2, k3, k4, k5, k6 = jax.random.split(key, 6)

    def u(k, shape, fan_in):
        bound = 1.0 / jnp.sqrt(fan_in)
        return jax.random.uniform(k, shape, jnp.float32, -bound, bound)

    w1 = u(k1, (16, 2), 2.0)
    b1 = u(k2, (16,), 2.0)
    w2 = u(k3, (16, 16), 16.0)
    b2 = u(k4, (16,), 16.0)
    w3 = u(k5, (1, 16), 16.0)
    b3 = u(k6, (1,), 16.0)
    return (w1, b1, w2, b2, w3, b3)


def _reference_forward(obs, params):
    w1, b1, w2, b2, w3, b3 = params
    h1 = jnp.maximum(obs @ w1.T + b1, 0.0)
    h2 = jnp.maximum(h1 @ w2.T + b2, 0.0)
    return h2 @ w3.T + b3


if __name__ == "__main__":
    key = jax.random.PRNGKey(0)
    pkey, xkey = jax.random.split(key)

    params = init_critic_params(pkey)

    # Small example batch matching the module contract (feature dim 2).
    obs = jax.random.normal(xkey, (8, 2), dtype=jnp.float32)
    v = jax.block_until_ready(critic_forward(obs, params))
    v_ref = _reference_forward(obs, params)
    assert v.shape == (8, 1)
    assert jnp.allclose(v, v_ref, atol=1e-5, rtol=1e-5)

    # Also exercise the multi-tile + ragged-tail path (B not a multiple of tb).
    obs2 = jax.random.normal(jax.random.PRNGKey(1), (1000, 2), dtype=jnp.float32)
    v2 = jax.block_until_ready(critic_forward(obs2, params))
    v2_ref = _reference_forward(obs2, params)
    assert v2.shape == (1000, 1)
    assert jnp.allclose(v2, v2_ref, atol=1e-4, rtol=1e-4)

    print("KERNEL_OK")
</pallas_src>

<mosaic_0001>
module attributes {stable_mosaic.version = 11 : i64} {
  func.func @_critic_kernel(%arg0: i32, %arg1: memref<2x128xf32, #tpu.memory_space<vmem>>, %arg2: memref<16x16xf32, #tpu.memory_space<vmem>>, %arg3: memref<16x8xf32, #tpu.memory_space<vmem>>, %arg4: memref<1x128xf32, #tpu.memory_space<vmem>>) attributes {dimension_semantics = [#tpu.dimension_semantics<parallel>], iteration_bounds = array<i64: 1>, scalar_prefetch = 0 : i64, scratch_operands = 0 : i64, tpu.core_type = #tpu.core_type<tc>, window_params = [{transform_indices = @transform_0, window_bounds = array<i64: 2, 128>}, {pipeline_mode = #tpu.pipeline_mode<synchronous>, transform_indices = @transform_1, window_bounds = array<i64: 16, 16>}, {pipeline_mode = #tpu.pipeline_mode<synchronous>, transform_indices = @transform_2, window_bounds = array<i64: 16, 8>}, {transform_indices = @transform_3, window_bounds = array<i64: 1, 128>}]} {
    %c0 = arith.constant 0 : index
    %c0_0 = arith.constant 0 : index
    %0 = vector.load %arg1[%c0, %c0_0] : memref<2x128xf32, #tpu.memory_space<vmem>>, vector<1x128xf32>
    %c1 = arith.constant 1 : index
    %c0_1 = arith.constant 0 : index
    %1 = vector.load %arg1[%c1, %c0_1] : memref<2x128xf32, #tpu.memory_space<vmem>>, vector<1x128xf32>
    %c0_2 = arith.constant 0 : index
    %c0_3 = arith.constant 0 : index
    %2 = vector.load %arg3[%c0_2, %c0_3] : memref<16x8xf32, #tpu.memory_space<vmem>>, vector<16x1xf32>
    %c0_4 = arith.constant 0 : index
    %c1_5 = arith.constant 1 : index
    %3 = vector.load %arg3[%c0_4, %c1_5] : memref<16x8xf32, #tpu.memory_space<vmem>>, vector<16x1xf32>
    %c0_6 = arith.constant 0 : index
    %c2 = arith.constant 2 : index
    %4 = vector.load %arg3[%c0_6, %c2] : memref<16x8xf32, #tpu.memory_space<vmem>>, vector<16x1xf32>
    %c0_7 = arith.constant 0 : index
    %c3 = arith.constant 3 : index
    %5 = vector.load %arg3[%c0_7, %c3] : memref<16x8xf32, #tpu.memory_space<vmem>>, vector<16x1xf32>
    %c0_8 = arith.constant 0 : index
    %c4 = arith.constant 4 : index
    %6 = vector.load %arg3[%c0_8, %c4] : memref<16x8xf32, #tpu.memory_space<vmem>>, vector<16x1xf32>
    %c0_9 = arith.constant 0 : index
    %c5 = arith.constant 5 : index
    %7 = vector.load %arg3[%c0_9, %c5] : memref<16x8xf32, #tpu.memory_space<vmem>>, vector<1x1xf32>
    %8 = vector.broadcast %2 : vector<16x1xf32> to vector<16x128xf32>
    %9 = vector.broadcast %0 : vector<1x128xf32> to vector<16x128xf32>
    %10 = arith.mulf %8, %9 : vector<16x128xf32>
    %11 = vector.broadcast %3 : vector<16x1xf32> to vector<16x128xf32>
    %12 = vector.broadcast %1 : vector<1x128xf32> to vector<16x128xf32>
    %13 = arith.mulf %11, %12 : vector<16x128xf32>
    %14 = arith.addf %10, %13 : vector<16x128xf32>
    %15 = vector.broadcast %4 : vector<16x1xf32> to vector<16x128xf32>
    %16 = arith.addf %14, %15 : vector<16x128xf32>
    %cst = arith.constant 0.000000e+00 : f32
    %17 = vector.broadcast %cst : f32 to vector<16x128xf32>
    %18 = arith.maximumf %16, %17 : vector<16x128xf32>
    %c0_10 = arith.constant 0 : index
    %c0_11 = arith.constant 0 : index
    %19 = vector.load %arg2[%c0_10, %c0_11] : memref<16x16xf32, #tpu.memory_space<vmem>>, vector<16x16xf32>
    %cst_12 = arith.constant dense<0.000000e+00> : vector<16x128xf32>
    %20 = tpu.matmul %19, %18, %cst_12 {dimension_numbers = #tpu.dot_dimension_numbers<[1], [0], [0], [1], [0, 0, 1, 1], [], []>} : vector<16x16xf32>, vector<16x128xf32>, vector<16x128xf32> -> vector<16x128xf32>
    %21 = vector.broadcast %5 : vector<16x1xf32> to vector<16x128xf32>
    %22 = arith.addf %20, %21 : vector<16x128xf32>
    %cst_13 = arith.constant 0.000000e+00 : f32
    %23 = vector.broadcast %cst_13 : f32 to vector<16x128xf32>
    %24 = arith.maximumf %22, %23 : vector<16x128xf32>
    %25 = vector.broadcast %6 : vector<16x1xf32> to vector<16x128xf32>
    %26 = arith.mulf %25, %24 : vector<16x128xf32>
    %cst_14 = arith.constant dense<0.000000e+00> : vector<128xf32>
    %27 = vector.multi_reduction <add>, %26, %cst_14 [0] : vector<16x128xf32> to vector<128xf32>
    %28 = vector.shape_cast %27 : vector<128xf32> to vector<1x128xf32>
    %29 = vector.broadcast %7 : vector<1x1xf32> to vector<1x128xf32>
    %30 = arith.addf %28, %29 : vector<1x128xf32>
    %c0_15 = arith.constant 0 : index
    %c0_16 = arith.constant 0 : index
    %31 = vector.load %arg4[%c0_15, %c0_16] : memref<1x128xf32, #tpu.memory_space<vmem>>, vector<1x128xf32>
    tpu.vector_store %arg4[%c0_15, %c0_16], %30 {strides = array<i32>} : memref<1x128xf32, #tpu.memory_space<vmem>>, vector<1x128xf32>,
    return
  }
  func.func @transform_0(%arg0: i32) -> (i32, i32) {
    %c0_i32 = arith.constant 0 : i32
    %c0_i32_0 = arith.constant 0 : i32
    return %c0_i32, %arg0 : i32, i32
  }
  func.func @transform_1(%arg0: i32) -> (i32, i32) {
    %c0_i32 = arith.constant 0 : i32
    %c0_i32_0 = arith.constant 0 : i32
    %c0_i32_1 = arith.constant 0 : i32
    return %c0_i32, %c0_i32_0 : i32, i32
  }
  func.func @transform_2(%arg0: i32) -> (i32, i32) {
    %c0_i32 = arith.constant 0 : i32
    %c0_i32_0 = arith.constant 0 : i32
    %c0_i32_1 = arith.constant 0 : i32
    return %c0_i32, %c0_i32_0 : i32, i32
  }
  func.func @transform_3(%arg0: i32) -> (i32, i32) {
    %c0_i32 = arith.constant 0 : i32
    %c0_i32_0 = arith.constant 0 : i32
    return %c0_i32, %arg0 : i32, i32
  }
}

</mosaic_0001>

<llo_original>
// kernel: tpu_custom_call.1
$region0: #{tpu_custom_call.1}
  #allocation0 [shape = 'u32[]', space=smem, size = 0x4, offset = 0x4, fixed_abs, tag = 'smem constant byte address 0x4 - core index']
  #allocation1 [shape = 'u32[144,128]{1,0:T(1,128)}', space=vmem, size = 0x12000, scoped, tag = 'internal scratch']
  %s0 = inlined_call_operand.vmem [shape: f32[2,8], index: 0, kind: input, shape index: {}]
  %s1 = inlined_call_operand.vmem [shape: f32[16,16], index: 1, kind: input, shape index: {}]
  %s2 = inlined_call_operand.vmem [shape: f32[16,8], index: 2, kind: input, shape index: {}]
  %s3 = inlined_call_operand.hbm [shape: f32[1,8], index: 3, kind: output, shape index: {}]
  %s4 = sld [smem:[#allocation0]]
  $region22: #{tpu_custom_call.1} parent=0
    _
  %s6 = ssub.s32 1, %s4
  %s7 = scalar_select 0, %s6, %s4
  $region1: #{tpu_custom_call.1} parent=0
    #allocation2 [shape = 'u8[512]{0}', space=vmem, size = 0x400, scoped, tag = 'output window, operand 0, single buffered']
    #allocation3 [shape = 's32[1]{0}', space=sflag, size = 0x4, scoped, tag = 'scoped memory for tpu_custom_call.1']
    %8 = vsyncpa [#allocation3], 0
    // Predicated region
    $region2: #{tpu_custom_call.1} parent=1 // pred_check
      _
    $region3: #{tpu_custom_call.1} parent=1 // pred_check_branch
      %10 = sbr.rel (0) target = $region5
    $region4: #{tpu_custom_call.1} parent=1 // pred_region
      _
    $region5: #{tpu_custom_call.1} parent=1 // pred_fallthru
      _
    // Predicated region
    $region6: #{tpu_custom_call.1} parent=1 // pred_check
      _
    $region7: #{tpu_custom_call.1} parent=1 // pred_check_branch
      %12 = sbr.rel (0) target = $region9
    $region8: #{tpu_custom_call.1} parent=1 // pred_region
      _
    $region9: #{tpu_custom_call.1} parent=1 // pred_fallthru
      _
    // Predicated region
    $region10: #{tpu_custom_call.1} parent=1 // pred_check
      _
    $region11: #{tpu_custom_call.1} parent=1 // pred_check_branch
      %14 = sbr.rel (0) target = $region13
    $region12: #{tpu_custom_call.1} parent=1 // pred_region
      _
    $region13: #{tpu_custom_call.1} parent=1 // pred_fallthru
      _
    %v15 = vld [vmem:[%s0] sm:$0x1]
    %v16 = vld [vmem:[%s0 + $0x1] sm:$0x1]
    %v17 = vld [vmem:[%s2] sm:$0xff]
    %v18 = vld [vmem:[%s2 + $0x8] sm:$0xff]
    %v19 = vld [vmem:[%s2] sm:$0x1]
    %21 = vset.pattern.permute.xlu0 0
    %22 = vperm.xlu0 %21, %v17
    %v23 = vpop.permute.xlu0 %22
    %26 = vset.pattern.permute.xlu0 0
    %27 = vperm.xlu0 %26, %v18
    %v28 = vpop.permute.xlu0 %27
    %v30 = vlaneseq
    %v31 = vshrl.u32 %v30, 7
    %v32 = vsub.s32 0, %v31
    %v33 = vrot.slane %v15, %v32
    %v34 = vmul.f32 %v23, %v33
    %v35 = vmul.f32 %v28, %v33
    %36 = vset.pattern.permute.xlu0 1
    %37 = vperm.xlu0 %36, %v17
    %v38 = vpop.permute.xlu0 %37
    %40 = vset.pattern.permute.xlu0 1
    %41 = vperm.xlu0 %40, %v18
    %v42 = vpop.permute.xlu0 %41
    %v44 = vlaneseq
    %v45 = vshrl.u32 %v44, 7
    %v46 = vsub.s32 0, %v45
    %v47 = vrot.slane %v16, %v46
    %v48 = vmul.f32 %v38, %v47
    %v49 = vmul.f32 %v42, %v47
    %v50 = vadd.f32 %v34, %v48
    %v51 = vadd.f32 %v35, %v49
    %52 = vset.pattern.permute.xlu0 2
    %53 = vperm.xlu0 %52, %v17
    %v54 = vpop.permute.xlu0 %53
    %56 = vset.pattern.permute.xlu0 2
    %57 = vperm.xlu0 %56, %v18
    %v58 = vpop.permute.xlu0 %57
    %v60 = vadd.f32 %v50, %v54
    %v61 = vadd.f32 %v51, %v58
    %v62 = vmax.f32 %v60, 0.0
    %v63 = vmax.f32 %v61, 0.0
    %v64 = vld [vmem:[%s1] sm:$0xff]
    %v65 = vld [vmem:[%s1 + $0x8] sm:$0xff]
    %66 = vset.pattern.permute.xlu0 3
    %67 = vperm.xlu0 %66, %v17
    %v68 = vpop.permute.xlu0 %67
    %70 = vset.pattern.permute.xlu0 3
    %71 = vperm.xlu0 %70, %v18
    %v72 = vpop.permute.xlu0 %71
    %vm74 = vcmask 130048
    %v76 = vsel %vm74, %v64, 0
    %v79 = vsel %vm74, %v65, 0
    %81 = vmatprep.subr.mxu0 0.0
    %82 = vmatpush1.msra.mxu0 %v62
    %83 = vmatprep.subr.mxu0 0.0
    %84 = vmatpush1.msra.mxu0 %v63
    %85 = vmatprep.subr.mxu0 0.0
    %86 = vmatpush1.msra.mxu0 0.0
    %87 = vmatprep.subr.mxu0 0.0
    %88 = vmatpush1.msra.mxu0 0.0
    %89 = vmatprep.subr.mxu0 0.0
    %90 = vmatpush1.msra.mxu0 0.0
    %91 = vmatprep.subr.mxu0 0.0
    %92 = vmatpush1.msra.mxu0 0.0
    %93 = vmatprep.subr.mxu0 0.0
    %94 = vmatpush1.msra.mxu0 0.0
    %95 = vmatprep.subr.mxu0 0.0
    %96 = vmatpush1.msra.mxu0 0.0
    %97 = vmatprep.subr.mxu0 0.0
    %98 = vmatpush1.msra.mxu0 0.0
    %99 = vmatprep.subr.mxu0 0.0
    %100 = vmatpush1.msra.mxu0 0.0
    %101 = vmatprep.subr.mxu0 0.0
    %102 = vmatpush1.msra.mxu0 0.0
    %103 = vmatprep.subr.mxu0 0.0
    %104 = vmatpush1.msra.mxu0 0.0
    %105 = vmatprep.subr.mxu0 0.0
    %106 = vmatpush1.msra.mxu0 0.0
    %107 = vmatprep.subr.mxu0 0.0
    %108 = vmatpush1.msra.mxu0 0.0
    %109 = vmatprep.subr.mxu0 0.0
    %110 = vmatpush1.msra.mxu0 0.0
    %111 = vmatprep.subr.mxu0 0.0
    %112 = vmatpush1.msra.mxu0 0.0
    %113 = vmatprep.subr.mxu0 0.0
    %114 = vmatpush1.msra.mxu0 0.0
    %115 = vmatprep.subr.mxu0 0.0
    %116 = vmatpush1.msra.mxu0 0.0
    %117 = vmatprep.subr.mxu0 0.0
    %118 = vmatpush1.msra.mxu0 0.0
    %119 = vmatprep.subr.mxu0 0.0
    %120 = vmatpush1.msra.mxu0 0.0
    %121 = vmatprep.subr.mxu0 0.0
    %122 = vmatpush1.msra.mxu0 0.0
    %123 = vmatprep.subr.mxu0 0.0
    %124 = vmatpush1.msra.mxu0 0.0
    %125 = vmatprep.subr.mxu0 0.0
    %126 = vmatpush1.msra.mxu0 0.0
    %127 = vmatprep.subr.mxu0 0.0
    %128 = vmatpush1.msra.mxu0 0.0
    %129 = vmatprep.subr.mxu0 0.0
    %130 = vmatpush1.msra.mxu0 0.0
    %131 = vmatprep.subr.mxu0 0.0
    %132 = vmatpush1.msra.mxu0 0.0
    %133 = vmatprep.subr.mxu0 0.0
    %134 = vmatpush1.msra.mxu0 0.0
    %135 = vmatprep.subr.mxu0 0.0
    %136 = vmatpush1.msra.mxu0 0.0
    %137 = vmatprep.subr.mxu0 0.0
    %138 = vmatpush1.msra.mxu0 0.0
    %139 = vmatprep.subr.mxu0 0.0
    %140 = vmatpush1.msra.mxu0 0.0
    %141 = vmatprep.subr.mxu0 0.0
    %142 = vmatpush1.msra.mxu0 0.0
    %143 = vmatprep.subr.mxu0 0.0
    %144 = vmatpush1.msra.mxu0 0.0
    %145 = vmatprep.mubr.f32.mxu0 0.0
    %146 = vmatmul.mubr.f32.gmra.mrb[0].mxu0 %v76
    %v147 = vpop.f32.mrb[0].mxu0
    %v148 = vadd.f32 %v68, %v147
    %v149 = vpop.f32.mrb[0].mxu0
    %150 = vmatprep.mubr.f32.mxu0 0.0
    %151 = vmatmul.mubr.f32.gmra.mrb[0].mxu0 %v79
    %v152 = vpop.f32.mrb[0].mxu0
    %v153 = vadd.f32 %v72, %v152
    %v154 = vpop.f32.mrb[0].mxu0
    %155 = vdwg.mxu0
    %v156 = vmax.f32 %v148, 0.0
    %v157 = vmax.f32 %v153, 0.0
    %158 = vset.pattern.permute.xlu0 4
    %159 = vperm.xlu0 %158, %v17
    %v160 = vpop.permute.xlu0 %159
    %162 = vset.pattern.permute.xlu0 4
    %163 = vperm.xlu0 %162, %v18
    %v164 = vpop.permute.xlu0 %163
    %v166 = vmul.f32 %v160, %v156
    %v167 = vmul.f32 %v164, %v157
    %v168 = vadd.f32 %v166, %v167
    %v169 = vrot.slane %v168, 4
    %v170 = vadd.f32 %v168, %v169
    %v171 = vrot.slane %v170, 2
    %v172 = vadd.f32 %v170, %v171
    %v173 = vrot.slane %v172, 1
    %v174 = vadd.f32 %v172, %v173
    %176 = vset.pattern.permute.xlu0 5
    %177 = vperm.xlu0 %176, %v19
    %v178 = vpop.permute.xlu0 %177
    %v180 = vadd.f32 %v174, %v178
    %181 = vst [vmem:[#allocation2] sm:$0x1] %v180
    // Predicated region
    $region14: #{tpu_custom_call.1} parent=1 // pred_check
      _
    $region15: #{tpu_custom_call.1} parent=1 // pred_check_branch
      %183 = sbr.rel (0) target = $region17
    $region16: #{tpu_custom_call.1} parent=1 // pred_region
      %s185 = ssub.s32 16, 16
      %186 = vsyncadd [#allocation3], %s185
      %s188 = sshll.u32 [#allocation2], 4
      %s189 = int_to_ptr.vmem [resolvable:$true] %s188
      %191 = dma.vmem_to_hbm [thread:$0]  %s189, 16, %s3, [#allocation3]
    $region17: #{tpu_custom_call.1} parent=1 // pred_fallthru
      _
    // Predicated region
    $region18: #{tpu_custom_call.1} parent=1 // pred_check
      _
    $region19: #{tpu_custom_call.1} parent=1 // pred_check_branch
      %193 = sbr.rel (0) target = $region21
    $region20: #{tpu_custom_call.1} parent=1 // pred_region
      %194 = dma.done [#allocation3], 16
    $region21: #{tpu_custom_call.1} parent=1 // pred_fallthru
      _
    %195 = vsyncpa [#allocation3], 1

</llo_original>
